<compile_context>
chip_gen: v7x
topology: tpu7x:2x2x1
jax: 0.10.0
libtpu: 0.0.40
codegen_flags: <defaults>
</compile_context>

<pallas_src>
import jax
import jax.numpy as jnp
from jax import lax
from jax.experimental import pallas as pl
from jax.experimental.pallas import tpu as pltpu

POLY_N = 3   # kernel statically unrolls powers 1..3
LANE = 128


def _round_up(v, m):
    return (v + m - 1) // m * m


def _onn_kernel(p_ref, w_ref, b_ref, o_ref):
    # p_ref: (4, TM, K0)      bf16  patches for the 4 taps of each 2x2 pool window
    # w_ref: (3*K0, CP)       bf16  conv weight, powers concatenated along K
    # b_ref: (1, CP)          f32   bias (zero-padded to CP lanes)
    # o_ref: (TM, CP)         f32
    four, tm, k0 = p_ref.shape

    # Fold the 4 pool taps into the M dimension -> one big matmul instead of 12 tiny ones.
    base = p_ref[...].astype(jnp.float32).reshape(four * tm, k0)
    b2 = base * base                       # powers in f32 (v5e has no bf16 VPU; precision)
    b3 = b2 * base

    # Fuse the polynomial powers along K (K0 -> 3*K0); single MXU push, f32 accumulation.
    xk = jnp.concatenate([base, b2, b3], axis=-1).astype(jnp.bfloat16)   # (4*TM, 3*K0)
    y = jnp.dot(xk, w_ref[...], preferred_element_type=jnp.float32)      # (4*TM, CP)

    y = jnp.tanh(y + b_ref[...])           # single bias broadcast + tanh
    y = y.reshape(four, tm, -1)
    o_ref[...] = jnp.max(y, axis=0).astype(o_ref.dtype)   # 2x2 max-pool (VPU max over taps)


def onn_layer_forward(x, weight, bias):
    """x: (N, Cin, H, W) f32 NCHW; weight: (Cout, Cin, 3, 3, 3); bias: (Cout,)."""
    N, C_in, H, W = x.shape
    C_out = weight.shape[0]
    assert weight.shape == (C_out, C_in, POLY_N, 3, 3)
    Ho, Wo = H - 2, W - 2
    Hp, Wp = Ho // 2, Wo // 2
    M = N * Hp * Wp                       # batch + spatial folded into one M axis
    K0 = 9 * C_in
    CP = _round_up(C_out, LANE)           # lane-dense output (unmasked vst)

    # M tile: multiple of 8, capped so the largest in-kernel f32 intermediate
    # (xk: 4*TM x 3*K0) stays within a small VMEM budget; <=512 rows.
    vmem_budget = 4 * 1024 * 1024
    tm_cap = max(8, (vmem_budget // (4 * 3 * K0 * 4)) // 8 * 8)
    TM = min(512, tm_cap, _round_up(M, 8))
    M_pad = _round_up(M, TM)

    # ---- glue: gather 3x3 patches, grouped by 2x2 pool-tap position (NHWC) ----
    x_nhwc = jnp.transpose(x, (0, 2, 3, 1))                          # (N, H, W, Cin)
    cols = [x_nhwc[:, kh:kh + Ho, kw:kw + Wo, :]
            for kh in range(3) for kw in range(3)]
    pat = jnp.concatenate(cols, axis=-1)                             # (N, Ho, Wo, K0)
    taps = [pat[:, dh:2 * Hp:2, dw:2 * Wp:2, :]
            for dh in range(2) for dw in range(2)]
    P = jnp.stack(taps, axis=0).reshape(4, M, K0)                    # (4, M, K0)
    P = jnp.pad(P, ((0, 0), (0, M_pad - M), (0, 0)))
    P = P.astype(jnp.bfloat16)       # bf16 MXU operand; halves HBM bytes of patch tensor

    # weight (Cout, Cin, p, kh, kw) -> (p, kh, kw, ci, co) -> (3*K0, CP), zero-padded cols
    w_flat = jnp.transpose(weight, (2, 3, 4, 1, 0)).reshape(POLY_N * K0, C_out)
    w_flat = jnp.pad(w_flat, ((0, 0), (0, CP - C_out))).astype(jnp.bfloat16)
    b_pad = jnp.pad(bias, (0, CP - C_out)).reshape(1, CP).astype(jnp.float32)

    grid = (M_pad // TM,)
    out = pl.pallas_call(
        _onn_kernel,
        out_shape=jax.ShapeDtypeStruct((M_pad, CP), jnp.float32),
        grid=grid,
        in_specs=[
            pl.BlockSpec((4, TM, K0), lambda m: (0, m, 0)),
            pl.BlockSpec((POLY_N * K0, CP), lambda m: (0, 0)),
            pl.BlockSpec((1, CP), lambda m: (0, 0)),
        ],
        out_specs=pl.BlockSpec((TM, CP), lambda m: (m, 0)),
        compiler_params=pltpu.CompilerParams(dimension_semantics=("parallel",)),
    )(P, w_flat, b_pad)

    out = out[:M, :C_out].reshape(N, Hp, Wp, C_out)
    return jnp.transpose(out, (0, 3, 1, 2)).astype(x.dtype)          # NCHW output


def onn_layer_reference(x, weight, bias, quantize_like_kernel=False):
    """Pure-JAX reference mirroring the PyTorch forward.

    With quantize_like_kernel=True it applies the same bf16 quantization to the
    matmul operands as the kernel (f32 accumulation), for a tight numerical check.
    """
    N, C_in, H, W = x.shape
    C_out = weight.shape[0]

    def q(v):
        return v.astype(jnp.bfloat16).astype(jnp.float32) if quantize_like_kernel else v

    xq = q(x)
    xe = jnp.concatenate([q(xq[:, :, None] ** (p + 1)) for p in range(POLY_N)], axis=2)
    xe2 = xe.reshape(N, C_in * POLY_N, H, W)          # fold (ci, p) -> channels
    w2 = q(weight).reshape(C_out, C_in * POLY_N, 3, 3)
    y = lax.conv_general_dilated(xe2, w2, (1, 1), "VALID",
                                 dimension_numbers=("NCHW", "OIHW", "NCHW"),
                                 precision=lax.Precision.HIGHEST)
    y = jnp.tanh(y + bias[None, :, None, None])
    Ho, Wo = H - 2, W - 2
    Hp, Wp = Ho // 2, Wo // 2
    y = y[:, :, :2 * Hp, :2 * Wp].reshape(N, C_out, Hp, 2, Wp, 2).max(axis=(3, 5))
    return y


if __name__ == "__main__":
    key = jax.random.PRNGKey(0)
    k_x, k_w, k_b = jax.random.split(key, 3)

    N, C_in, C_out, H, W = 2, 4, 8, 16, 16
    x = jax.random.normal(k_x, (N, C_in, H, W), dtype=jnp.float32)
    weight = 0.1 * jax.random.normal(k_w, (C_out, C_in, POLY_N, 3, 3), dtype=jnp.float32)
    bias = 0.1 * jax.random.normal(k_b, (C_out,), dtype=jnp.float32)

    out = jax.block_until_ready(onn_layer_forward(x, weight, bias))
    assert out.shape == (N, C_out, (H - 2) // 2, (W - 2) // 2), out.shape

    # Tight check against a reference with the same bf16 operand quantization.
    ref_q = onn_layer_reference(x, weight, bias, quantize_like_kernel=True)
    assert jnp.allclose(out, ref_q, rtol=0.0, atol=1e-3), \
        float(jnp.max(jnp.abs(out - ref_q)))

    # Loose sanity check against the pure-f32 reference (bf16 MXU operands).
    ref_f = onn_layer_reference(x, weight, bias, quantize_like_kernel=False)
    assert jnp.allclose(out, ref_f, rtol=0.0, atol=1.5e-1), \
        float(jnp.max(jnp.abs(out - ref_f)))

    print("KERNEL_OK")
</pallas_src>

<mosaic_0001>
module attributes {stable_mosaic.version = 11 : i64} {
  func.func @_onn_kernel(%arg0: i32, %arg1: memref<4x104x36xbf16, #tpu.memory_space<vmem>>, %arg2: memref<108x128xbf16, #tpu.memory_space<vmem>>, %arg3: memref<1x128xf32, #tpu.memory_space<vmem>>, %arg4: memref<104x128xf32, #tpu.memory_space<vmem>>) attributes {dimension_semantics = [#tpu.dimension_semantics<parallel>], iteration_bounds = array<i64: 1>, scalar_prefetch = 0 : i64, scratch_operands = 0 : i64, tpu.core_type = #tpu.core_type<tc>, window_params = [{transform_indices = @transform_0, window_bounds = array<i64: 4, 104, 36>}, {pipeline_mode = #tpu.pipeline_mode<synchronous>, transform_indices = @transform_1, window_bounds = array<i64: 108, 128>}, {pipeline_mode = #tpu.pipeline_mode<synchronous>, transform_indices = @transform_2, window_bounds = array<i64: 1, 128>}, {transform_indices = @transform_3, window_bounds = array<i64: 104, 128>}]} {
    %c0 = arith.constant 0 : index
    %c0_0 = arith.constant 0 : index
    %c0_1 = arith.constant 0 : index
    %0 = vector.load %arg1[%c0, %c0_0, %c0_1] : memref<4x104x36xbf16, #tpu.memory_space<vmem>>, vector<4x104x36xbf16>
    %1 = arith.extf %0 : vector<4x104x36xbf16> to vector<4x104x36xf32>
    %2 = vector.shape_cast %1 : vector<4x104x36xf32> to vector<416x36xf32>
    %3 = arith.mulf %2, %2 : vector<416x36xf32>
    %4 = arith.mulf %3, %2 : vector<416x36xf32>
    %5 = tpu.concatenate %2, %3, %4 in 1 : vector<416x36xf32>, vector<416x36xf32>, vector<416x36xf32> -> vector<416x108xf32>
    %6 = arith.truncf %5 : vector<416x108xf32> to vector<416x108xbf16>
    %c0_2 = arith.constant 0 : index
    %c0_3 = arith.constant 0 : index
    %7 = vector.load %arg2[%c0_2, %c0_3] : memref<108x128xbf16, #tpu.memory_space<vmem>>, vector<108x128xbf16>
    %cst = arith.constant dense<0.000000e+00> : vector<416x128xf32>
    %8 = tpu.matmul %6, %7, %cst {dimension_numbers = #tpu.dot_dimension_numbers<[1], [0], [0], [1], [0, 0, 1, 1], [], []>} : vector<416x108xbf16>, vector<108x128xbf16>, vector<416x128xf32> -> vector<416x128xf32>
    %c0_4 = arith.constant 0 : index
    %c0_5 = arith.constant 0 : index
    %9 = vector.load %arg3[%c0_4, %c0_5] : memref<1x128xf32, #tpu.memory_space<vmem>>, vector<1x128xf32>
    %10 = vector.broadcast %9 : vector<1x128xf32> to vector<416x128xf32>
    %11 = arith.addf %8, %10 : vector<416x128xf32>
    %12 = math.tanh %11 : vector<416x128xf32>
    %13 = vector.shape_cast %12 : vector<416x128xf32> to vector<4x104x128xf32>
    %cst_6 = arith.constant dense<0xFF800000> : vector<104x128xf32>
    %14 = vector.multi_reduction <maximumf>, %13, %cst_6 [0] : vector<4x104x128xf32> to vector<104x128xf32>
    %c0_7 = arith.constant 0 : index
    %c0_8 = arith.constant 0 : index
    %15 = vector.load %arg4[%c0_7, %c0_8] : memref<104x128xf32, #tpu.memory_space<vmem>>, vector<104x128xf32>
    tpu.vector_store %arg4[%c0_7, %c0_8], %14 {strides = array<i32>} : memref<104x128xf32, #tpu.memory_space<vmem>>, vector<104x128xf32>,
    return
  }
  func.func @transform_0(%arg0: i32) -> (i32, i32, i32) {
    %c0_i32 = arith.constant 0 : i32
    %c0_i32_0 = arith.constant 0 : i32
    %c0_i32_1 = arith.constant 0 : i32
    return %c0_i32, %arg0, %c0_i32_0 : i32, i32, i32
  }
  func.func @transform_1(%arg0: i32) -> (i32, i32) {
    %c0_i32 = arith.constant 0 : i32
    %c0_i32_0 = arith.constant 0 : i32
    %c0_i32_1 = arith.constant 0 : i32
    return %c0_i32, %c0_i32_0 : i32, i32
  }
  func.func @transform_2(%arg0: i32) -> (i32, i32) {
    %c0_i32 = arith.constant 0 : i32
    %c0_i32_0 = arith.constant 0 : i32
    %c0_i32_1 = arith.constant 0 : i32
    return %c0_i32, %c0_i32_0 : i32, i32
  }
  func.func @transform_3(%arg0: i32) -> (i32, i32) {
    %c0_i32 = arith.constant 0 : i32
    %c0_i32_0 = arith.constant 0 : i32
    return %arg0, %c0_i32 : i32, i32
  }
}

</mosaic_0001>

<llo_original>
// kernel: tpu_custom_call.1
$region0: #{tpu_custom_call.1}
  #allocation0 [shape = 'u32[]', space=smem, size = 0x4, offset = 0x4, fixed_abs, tag = 'smem constant byte address 0x4 - core index']
  #allocation1 [shape = 'u32[144,128]{1,0:T(1,128)}', space=vmem, size = 0x12000, scoped, tag = 'internal scratch']
  %s0 = inlined_call_operand.vmem [shape: bf16[4,104,36], index: 0, kind: input, shape index: {}]
  %s1 = inlined_call_operand.vmem [shape: bf16[108,128], index: 1, kind: input, shape index: {}]
  %s2 = inlined_call_operand.vmem [shape: f32[1,128], index: 2, kind: input, shape index: {}]
  %s3 = inlined_call_operand.hbm [shape: f32[104,128], index: 3, kind: output, shape index: {}]
  %s4 = sld [smem:[#allocation0]]
  $region22: #{tpu_custom_call.1} parent=0
    _
  %s6 = ssub.s32 1, %s4
  %s7 = scalar_select 0, %s6, %s4
  $region1: #{tpu_custom_call.1} parent=0
    #allocation2 [shape = 'u8[53248]{0}', space=vmem, size = 0xd000, scoped, tag = 'output window, operand 0, single buffered']
    #allocation3 [shape = 's32[1]{0}', space=sflag, size = 0x4, scoped, tag = 'scoped memory for tpu_custom_call.1']
    %8 = vsyncpa [#allocation3], 0
    // Predicated region
    $region2: #{tpu_custom_call.1} parent=1 // pred_check
      _
    $region3: #{tpu_custom_call.1} parent=1 // pred_check_branch
      %10 = sbr.rel (0) target = $region5
    $region4: #{tpu_custom_call.1} parent=1 // pred_region
      _
    $region5: #{tpu_custom_call.1} parent=1 // pred_fallthru
      _
    // Predicated region
    $region6: #{tpu_custom_call.1} parent=1 // pred_check
      _
    $region7: #{tpu_custom_call.1} parent=1 // pred_check_branch
      %12 = sbr.rel (0) target = $region9
    $region8: #{tpu_custom_call.1} parent=1 // pred_region
      _
    $region9: #{tpu_custom_call.1} parent=1 // pred_fallthru
      _
    // Predicated region
    $region10: #{tpu_custom_call.1} parent=1 // pred_check
      _
    $region11: #{tpu_custom_call.1} parent=1 // pred_check_branch
      %14 = sbr.rel (0) target = $region13
    $region12: #{tpu_custom_call.1} parent=1 // pred_region
      _
    $region13: #{tpu_custom_call.1} parent=1 // pred_fallthru
      _
    %v16 = vld [vmem:[%s0] sm:$0xf]
    %v17 = vld [vmem:[%s0 + $0x4] sm:$0xf]
    %v18 = vld [vmem:[%s0 + $0x8] sm:$0xf]
    %v19 = vld [vmem:[%s0 + $0xc] sm:$0xf]
    %v20 = vld [vmem:[%s0 + $0x10] sm:$0xf]
    %v21 = vld [vmem:[%s0 + $0x14] sm:$0xf]
    %v22 = vld [vmem:[%s0 + $0x18] sm:$0xf]
    %v23 = vld [vmem:[%s0 + $0x1c] sm:$0xf]
    %v24 = vld [vmem:[%s0 + $0x20] sm:$0xf]
    %v25 = vld [vmem:[%s0 + $0x24] sm:$0xf]
    %v26 = vld [vmem:[%s0 + $0x28] sm:$0xf]
    %v27 = vld [vmem:[%s0 + $0x2c] sm:$0xf]
    %v28 = vld [vmem:[%s0 + $0x30] sm:$0xf]
    %v29 = vld [vmem:[%s0 + $0x34] sm:$0xf]
    %v30 = vld [vmem:[%s0 + $0x38] sm:$0xf]
    %v31 = vld [vmem:[%s0 + $0x3c] sm:$0xf]
    %v32 = vld [vmem:[%s0 + $0x40] sm:$0xf]
    %v33 = vld [vmem:[%s0 + $0x44] sm:$0xf]
    %v34 = vld [vmem:[%s0 + $0x48] sm:$0xf]
    %v35 = vld [vmem:[%s0 + $0x4c] sm:$0xf]
    %v36 = vld [vmem:[%s0 + $0x50] sm:$0xf]
    %v37 = vld [vmem:[%s0 + $0x54] sm:$0xf]
    %v38 = vld [vmem:[%s0 + $0x58] sm:$0xf]
    %v39 = vld [vmem:[%s0 + $0x5c] sm:$0xf]
    %v40 = vld [vmem:[%s0 + $0x60] sm:$0xf]
    %v41 = vld [vmem:[%s0 + $0x64] sm:$0xf]
    %v42 = vld [vmem:[%s0 + $0x68] sm:$0xf]
    %v43 = vld [vmem:[%s0 + $0x6c] sm:$0xf]
    %v44 = vld [vmem:[%s0 + $0x70] sm:$0xf]
    %v45 = vld [vmem:[%s0 + $0x74] sm:$0xf]
    %v46 = vld [vmem:[%s0 + $0x78] sm:$0xf]
    %v47 = vld [vmem:[%s0 + $0x7c] sm:$0xf]
    %v48 = vld [vmem:[%s0 + $0x80] sm:$0xf]
    %v49 = vld [vmem:[%s0 + $0x84] sm:$0xf]
    %v50 = vld [vmem:[%s0 + $0x88] sm:$0xf]
    %v51 = vld [vmem:[%s0 + $0x8c] sm:$0xf]
    %v52 = vld [vmem:[%s0 + $0x90] sm:$0xf]
    %v53 = vld [vmem:[%s0 + $0x94] sm:$0xf]
    %v54 = vld [vmem:[%s0 + $0x98] sm:$0xf]
    %v55 = vld [vmem:[%s0 + $0x9c] sm:$0xf]
    %v56 = vld [vmem:[%s0 + $0xa0] sm:$0xf]
    %v57 = vld [vmem:[%s0 + $0xa4] sm:$0xf]
    %v58 = vld [vmem:[%s0 + $0xa8] sm:$0xf]
    %v59 = vld [vmem:[%s0 + $0xac] sm:$0xf]
    %v60 = vld [vmem:[%s0 + $0xb0] sm:$0xf]
    %v61 = vld [vmem:[%s0 + $0xb4] sm:$0xf]
    %v62 = vld [vmem:[%s0 + $0xb8] sm:$0xf]
    %v63 = vld [vmem:[%s0 + $0xbc] sm:$0xf]
    %v64 = vld [vmem:[%s0 + $0xc0] sm:$0xf]
    %v65 = vld [vmem:[%s0 + $0xc4] sm:$0xf]
    %v66 = vld [vmem:[%s0 + $0xc8] sm:$0xf]
    %v67 = vld [vmem:[%s0 + $0xcc] sm:$0xf]
    %v68 = vunpack.c.l.bf16 %v16
    %v69 = vunpack.c.l.bf16 %v17
    %v70 = vunpack.c.l.bf16 %v18
    %v71 = vunpack.c.l.bf16 %v19
    %v72 = vunpack.c.l.bf16 %v20
    %v73 = vunpack.c.l.bf16 %v21
    %v74 = vunpack.c.l.bf16 %v22
    %v75 = vunpack.c.l.bf16 %v23
    %v76 = vunpack.c.l.bf16 %v24
    %v77 = vunpack.c.l.bf16 %v25
    %v78 = vunpack.c.l.bf16 %v26
    %v79 = vunpack.c.l.bf16 %v27
    %v80 = vunpack.c.l.bf16 %v28
    %v81 = vunpack.c.l.bf16 %v29
    %v82 = vunpack.c.l.bf16 %v30
    %v83 = vunpack.c.l.bf16 %v31
    %v84 = vunpack.c.l.bf16 %v32
    %v85 = vunpack.c.l.bf16 %v33
    %v86 = vunpack.c.l.bf16 %v34
    %v87 = vunpack.c.l.bf16 %v35
    %v88 = vunpack.c.l.bf16 %v36
    %v89 = vunpack.c.l.bf16 %v37
    %v90 = vunpack.c.l.bf16 %v38
    %v91 = vunpack.c.l.bf16 %v39
    %v92 = vunpack.c.l.bf16 %v40
    %v93 = vunpack.c.l.bf16 %v41
    %v94 = vunpack.c.l.bf16 %v42
    %v95 = vunpack.c.l.bf16 %v43
    %v96 = vunpack.c.l.bf16 %v44
    %v97 = vunpack.c.l.bf16 %v45
    %v98 = vunpack.c.l.bf16 %v46
    %v99 = vunpack.c.l.bf16 %v47
    %v100 = vunpack.c.l.bf16 %v48
    %v101 = vunpack.c.l.bf16 %v49
    %v102 = vunpack.c.l.bf16 %v50
    %v103 = vunpack.c.l.bf16 %v51
    %v104 = vunpack.c.l.bf16 %v52
    %v105 = vunpack.c.l.bf16 %v53
    %v106 = vunpack.c.l.bf16 %v54
    %v107 = vunpack.c.l.bf16 %v55
    %v108 = vunpack.c.l.bf16 %v56
    %v109 = vunpack.c.l.bf16 %v57
    %v110 = vunpack.c.l.bf16 %v58
    %v111 = vunpack.c.l.bf16 %v59
    %v112 = vunpack.c.l.bf16 %v60
    %v113 = vunpack.c.l.bf16 %v61
    %v114 = vunpack.c.l.bf16 %v62
    %v115 = vunpack.c.l.bf16 %v63
    %v116 = vunpack.c.l.bf16 %v64
    %v117 = vunpack.c.l.bf16 %v65
    %v118 = vunpack.c.l.bf16 %v66
    %v119 = vunpack.c.l.bf16 %v67
    %v120 = vmul.f32 %v68, %v68
    %v121 = vmul.f32 %v69, %v69
    %v122 = vmul.f32 %v70, %v70
    %v123 = vmul.f32 %v71, %v71
    %v124 = vmul.f32 %v72, %v72
    %v125 = vmul.f32 %v73, %v73
    %v126 = vmul.f32 %v74, %v74
    %v127 = vmul.f32 %v75, %v75
    %v128 = vmul.f32 %v76, %v76
    %v129 = vmul.f32 %v77, %v77
    %v130 = vmul.f32 %v78, %v78
    %v131 = vmul.f32 %v79, %v79
    %v132 = vmul.f32 %v80, %v80
    %v133 = vmul.f32 %v81, %v81
    %v134 = vmul.f32 %v82, %v82
    %v135 = vmul.f32 %v83, %v83
    %v136 = vmul.f32 %v84, %v84
    %v137 = vmul.f32 %v85, %v85
    %v138 = vmul.f32 %v86, %v86
    %v139 = vmul.f32 %v87, %v87
    %v140 = vmul.f32 %v88, %v88
    %v141 = vmul.f32 %v89, %v89
    %v142 = vmul.f32 %v90, %v90
    %v143 = vmul.f32 %v91, %v91
    %v144 = vmul.f32 %v92, %v92
    %v145 = vmul.f32 %v93, %v93
    %v146 = vmul.f32 %v94, %v94
    %v147 = vmul.f32 %v95, %v95
    %v148 = vmul.f32 %v96, %v96
    %v149 = vmul.f32 %v97, %v97
    %v150 = vmul.f32 %v98, %v98
    %v151 = vmul.f32 %v99, %v99
    %v152 = vmul.f32 %v100, %v100
    %v153 = vmul.f32 %v101, %v101
    %v154 = vmul.f32 %v102, %v102
    %v155 = vmul.f32 %v103, %v103
    %v156 = vmul.f32 %v104, %v104
    %v157 = vmul.f32 %v105, %v105
    %v158 = vmul.f32 %v106, %v106
    %v159 = vmul.f32 %v107, %v107
    %v160 = vmul.f32 %v108, %v108
    %v161 = vmul.f32 %v109, %v109
    %v162 = vmul.f32 %v110, %v110
    %v163 = vmul.f32 %v111, %v111
    %v164 = vmul.f32 %v112, %v112
    %v165 = vmul.f32 %v113, %v113
    %v166 = vmul.f32 %v114, %v114
    %v167 = vmul.f32 %v115, %v115
    %v168 = vmul.f32 %v116, %v116
    %v169 = vmul.f32 %v117, %v117
    %v170 = vmul.f32 %v118, %v118
    %v171 = vmul.f32 %v119, %v119
    %v172 = vmul.f32 %v120, %v68
    %v173 = vmul.f32 %v121, %v69
    %v174 = vmul.f32 %v122, %v70
    %v175 = vmul.f32 %v123, %v71
    %v176 = vmul.f32 %v124, %v72
    %v177 = vmul.f32 %v125, %v73
    %v178 = vmul.f32 %v126, %v74
    %v179 = vmul.f32 %v127, %v75
    %v180 = vmul.f32 %v128, %v76
    %v181 = vmul.f32 %v129, %v77
    %v182 = vmul.f32 %v130, %v78
    %v183 = vmul.f32 %v131, %v79
    %v184 = vmul.f32 %v132, %v80
    %v185 = vmul.f32 %v133, %v81
    %v186 = vmul.f32 %v134, %v82
    %v187 = vmul.f32 %v135, %v83
    %v188 = vmul.f32 %v136, %v84
    %v189 = vmul.f32 %v137, %v85
    %v190 = vmul.f32 %v138, %v86
    %v191 = vmul.f32 %v139, %v87
    %v192 = vmul.f32 %v140, %v88
    %v193 = vmul.f32 %v141, %v89
    %v194 = vmul.f32 %v142, %v90
    %v195 = vmul.f32 %v143, %v91
    %v196 = vmul.f32 %v144, %v92
    %v197 = vmul.f32 %v145, %v93
    %v198 = vmul.f32 %v146, %v94
    %v199 = vmul.f32 %v147, %v95
    %v200 = vmul.f32 %v148, %v96
    %v201 = vmul.f32 %v149, %v97
    %v202 = vmul.f32 %v150, %v98
    %v203 = vmul.f32 %v151, %v99
    %v204 = vmul.f32 %v152, %v100
    %v205 = vmul.f32 %v153, %v101
    %v206 = vmul.f32 %v154, %v102
    %v207 = vmul.f32 %v155, %v103
    %v208 = vmul.f32 %v156, %v104
    %v209 = vmul.f32 %v157, %v105
    %v210 = vmul.f32 %v158, %v106
    %v211 = vmul.f32 %v159, %v107
    %v212 = vmul.f32 %v160, %v108
    %v213 = vmul.f32 %v161, %v109
    %v214 = vmul.f32 %v162, %v110
    %v215 = vmul.f32 %v163, %v111
    %v216 = vmul.f32 %v164, %v112
    %v217 = vmul.f32 %v165, %v113
    %v218 = vmul.f32 %v166, %v114
    %v219 = vmul.f32 %v167, %v115
    %v220 = vmul.f32 %v168, %v116
    %v221 = vmul.f32 %v169, %v117
    %v222 = vmul.f32 %v170, %v118
    %v223 = vmul.f32 %v171, %v119
    %276 = vrot.lane.b32.xlu0 %v120, 36
    %v277 = vpop.permute.xlu0 %276
    %278 = vrot.lane.b32.xlu0 %v121, 36
    %v279 = vpop.permute.xlu0 %278
    %280 = vrot.lane.b32.xlu0 %v122, 36
    %v281 = vpop.permute.xlu0 %280
    %282 = vrot.lane.b32.xlu0 %v123, 36
    %v283 = vpop.permute.xlu0 %282
    %284 = vrot.lane.b32.xlu0 %v124, 36
    %v285 = vpop.permute.xlu0 %284
    %286 = vrot.lane.b32.xlu0 %v125, 36
    %v287 = vpop.permute.xlu0 %286
    %288 = vrot.lane.b32.xlu0 %v126, 36
    %v289 = vpop.permute.xlu0 %288
    %290 = vrot.lane.b32.xlu0 %v127, 36
    %v291 = vpop.permute.xlu0 %290
    %292 = vrot.lane.b32.xlu0 %v128, 36
    %v293 = vpop.permute.xlu0 %292
    %294 = vrot.lane.b32.xlu0 %v129, 36
    %v295 = vpop.permute.xlu0 %294
    %296 = vrot.lane.b32.xlu0 %v130, 36
    %v297 = vpop.permute.xlu0 %296
    %298 = vrot.lane.b32.xlu0 %v131, 36
    %v299 = vpop.permute.xlu0 %298
    %300 = vrot.lane.b32.xlu0 %v132, 36
    %v301 = vpop.permute.xlu0 %300
    %302 = vrot.lane.b32.xlu0 %v133, 36
    %v303 = vpop.permute.xlu0 %302
    %304 = vrot.lane.b32.xlu0 %v134, 36
    %v305 = vpop.permute.xlu0 %304
    %306 = vrot.lane.b32.xlu0 %v135, 36
    %v307 = vpop.permute.xlu0 %306
    %308 = vrot.lane.b32.xlu0 %v136, 36
    %v309 = vpop.permute.xlu0 %308
    %310 = vrot.lane.b32.xlu0 %v137, 36
    %v311 = vpop.permute.xlu0 %310
    %312 = vrot.lane.b32.xlu0 %v138, 36
    %v313 = vpop.permute.xlu0 %312
    %314 = vrot.lane.b32.xlu0 %v139, 36
    %v315 = vpop.permute.xlu0 %314
    %316 = vrot.lane.b32.xlu0 %v140, 36
    %v317 = vpop.permute.xlu0 %316
    %318 = vrot.lane.b32.xlu0 %v141, 36
    %v319 = vpop.permute.xlu0 %318
    %320 = vrot.lane.b32.xlu0 %v142, 36
    %v321 = vpop.permute.xlu0 %320
    %322 = vrot.lane.b32.xlu0 %v143, 36
    %v323 = vpop.permute.xlu0 %322
    %324 = vrot.lane.b32.xlu0 %v144, 36
    %v325 = vpop.permute.xlu0 %324
    %326 = vrot.lane.b32.xlu0 %v145, 36
    %v327 = vpop.permute.xlu0 %326
    %328 = vrot.lane.b32.xlu0 %v146, 36
    %v329 = vpop.permute.xlu0 %328
    %330 = vrot.lane.b32.xlu0 %v147, 36
    %v331 = vpop.permute.xlu0 %330
    %332 = vrot.lane.b32.xlu0 %v148, 36
    %v333 = vpop.permute.xlu0 %332
    %334 = vrot.lane.b32.xlu0 %v149, 36
    %v335 = vpop.permute.xlu0 %334
    %336 = vrot.lane.b32.xlu0 %v150, 36
    %v337 = vpop.permute.xlu0 %336
    %338 = vrot.lane.b32.xlu0 %v151, 36
    %v339 = vpop.permute.xlu0 %338
    %340 = vrot.lane.b32.xlu0 %v152, 36
    %v341 = vpop.permute.xlu0 %340
    %342 = vrot.lane.b32.xlu0 %v153, 36
    %v343 = vpop.permute.xlu0 %342
    %344 = vrot.lane.b32.xlu0 %v154, 36
    %v345 = vpop.permute.xlu0 %344
    %346 = vrot.lane.b32.xlu0 %v155, 36
    %v347 = vpop.permute.xlu0 %346
    %348 = vrot.lane.b32.xlu0 %v156, 36
    %v349 = vpop.permute.xlu0 %348
    %350 = vrot.lane.b32.xlu0 %v157, 36
    %v351 = vpop.permute.xlu0 %350
    %352 = vrot.lane.b32.xlu0 %v158, 36
    %v353 = vpop.permute.xlu0 %352
    %354 = vrot.lane.b32.xlu0 %v159, 36
    %v355 = vpop.permute.xlu0 %354
    %356 = vrot.lane.b32.xlu0 %v160, 36
    %v357 = vpop.permute.xlu0 %356
    %358 = vrot.lane.b32.xlu0 %v161, 36
    %v359 = vpop.permute.xlu0 %358
    %360 = vrot.lane.b32.xlu0 %v162, 36
    %v361 = vpop.permute.xlu0 %360
    %362 = vrot.lane.b32.xlu0 %v163, 36
    %v363 = vpop.permute.xlu0 %362
    %364 = vrot.lane.b32.xlu0 %v164, 36
    %v365 = vpop.permute.xlu0 %364
    %366 = vrot.lane.b32.xlu0 %v165, 36
    %v367 = vpop.permute.xlu0 %366
    %368 = vrot.lane.b32.xlu0 %v166, 36
    %v369 = vpop.permute.xlu0 %368
    %370 = vrot.lane.b32.xlu0 %v167, 36
    %v371 = vpop.permute.xlu0 %370
    %372 = vrot.lane.b32.xlu0 %v168, 36
    %v373 = vpop.permute.xlu0 %372
    %374 = vrot.lane.b32.xlu0 %v169, 36
    %v375 = vpop.permute.xlu0 %374
    %376 = vrot.lane.b32.xlu0 %v170, 36
    %v377 = vpop.permute.xlu0 %376
    %378 = vrot.lane.b32.xlu0 %v171, 36
    %v379 = vpop.permute.xlu0 %378
    %484 = vrot.lane.b32.xlu0 %v172, 72
    %v485 = vpop.permute.xlu0 %484
    %486 = vrot.lane.b32.xlu0 %v173, 72
    %v487 = vpop.permute.xlu0 %486
    %488 = vrot.lane.b32.xlu0 %v174, 72
    %v489 = vpop.permute.xlu0 %488
    %490 = vrot.lane.b32.xlu0 %v175, 72
    %v491 = vpop.permute.xlu0 %490
    %492 = vrot.lane.b32.xlu0 %v176, 72
    %v493 = vpop.permute.xlu0 %492
    %494 = vrot.lane.b32.xlu0 %v177, 72
    %v495 = vpop.permute.xlu0 %494
    %496 = vrot.lane.b32.xlu0 %v178, 72
    %v497 = vpop.permute.xlu0 %496
    %498 = vrot.lane.b32.xlu0 %v179, 72
    %v499 = vpop.permute.xlu0 %498
    %500 = vrot.lane.b32.xlu0 %v180, 72
    %v501 = vpop.permute.xlu0 %500
    %502 = vrot.lane.b32.xlu0 %v181, 72
    %v503 = vpop.permute.xlu0 %502
    %504 = vrot.lane.b32.xlu0 %v182, 72
    %v505 = vpop.permute.xlu0 %504
    %506 = vrot.lane.b32.xlu0 %v183, 72
    %v507 = vpop.permute.xlu0 %506
    %508 = vrot.lane.b32.xlu0 %v184, 72
    %v509 = vpop.permute.xlu0 %508
    %510 = vrot.lane.b32.xlu0 %v185, 72
    %v511 = vpop.permute.xlu0 %510
    %512 = vrot.lane.b32.xlu0 %v186, 72
    %v513 = vpop.permute.xlu0 %512
    %514 = vrot.lane.b32.xlu0 %v187, 72
    %v515 = vpop.permute.xlu0 %514
    %516 = vrot.lane.b32.xlu0 %v188, 72
    %v517 = vpop.permute.xlu0 %516
    %518 = vrot.lane.b32.xlu0 %v189, 72
    %v519 = vpop.permute.xlu0 %518
    %520 = vrot.lane.b32.xlu0 %v190, 72
    %v521 = vpop.permute.xlu0 %520
    %522 = vrot.lane.b32.xlu0 %v191, 72
    %v523 = vpop.permute.xlu0 %522
    %524 = vrot.lane.b32.xlu0 %v192, 72
    %v525 = vpop.permute.xlu0 %524
    %526 = vrot.lane.b32.xlu0 %v193, 72
    %v527 = vpop.permute.xlu0 %526
    %528 = vrot.lane.b32.xlu0 %v194, 72
    %v529 = vpop.permute.xlu0 %528
    %530 = vrot.lane.b32.xlu0 %v195, 72
    %v531 = vpop.permute.xlu0 %530
    %532 = vrot.lane.b32.xlu0 %v196, 72
    %v533 = vpop.permute.xlu0 %532
    %534 = vrot.lane.b32.xlu0 %v197, 72
    %v535 = vpop.permute.xlu0 %534
    %536 = vrot.lane.b32.xlu0 %v198, 72
    %v537 = vpop.permute.xlu0 %536
    %538 = vrot.lane.b32.xlu0 %v199, 72
    %v539 = vpop.permute.xlu0 %538
    %540 = vrot.lane.b32.xlu0 %v200, 72
    %v541 = vpop.permute.xlu0 %540
    %542 = vrot.lane.b32.xlu0 %v201, 72
    %v543 = vpop.permute.xlu0 %542
    %544 = vrot.lane.b32.xlu0 %v202, 72
    %v545 = vpop.permute.xlu0 %544
    %546 = vrot.lane.b32.xlu0 %v203, 72
    %v547 = vpop.permute.xlu0 %546
    %548 = vrot.lane.b32.xlu0 %v204, 72
    %v549 = vpop.permute.xlu0 %548
    %550 = vrot.lane.b32.xlu0 %v205, 72
    %v551 = vpop.permute.xlu0 %550
    %552 = vrot.lane.b32.xlu0 %v206, 72
    %v553 = vpop.permute.xlu0 %552
    %554 = vrot.lane.b32.xlu0 %v207, 72
    %v555 = vpop.permute.xlu0 %554
    %556 = vrot.lane.b32.xlu0 %v208, 72
    %v557 = vpop.permute.xlu0 %556
    %558 = vrot.lane.b32.xlu0 %v209, 72
    %v559 = vpop.permute.xlu0 %558
    %560 = vrot.lane.b32.xlu0 %v210, 72
    %v561 = vpop.permute.xlu0 %560
    %562 = vrot.lane.b32.xlu0 %v211, 72
    %v563 = vpop.permute.xlu0 %562
    %564 = vrot.lane.b32.xlu0 %v212, 72
    %v565 = vpop.permute.xlu0 %564
    %566 = vrot.lane.b32.xlu0 %v213, 72
    %v567 = vpop.permute.xlu0 %566
    %568 = vrot.lane.b32.xlu0 %v214, 72
    %v569 = vpop.permute.xlu0 %568
    %570 = vrot.lane.b32.xlu0 %v215, 72
    %v571 = vpop.permute.xlu0 %570
    %572 = vrot.lane.b32.xlu0 %v216, 72
    %v573 = vpop.permute.xlu0 %572
    %574 = vrot.lane.b32.xlu0 %v217, 72
    %v575 = vpop.permute.xlu0 %574
    %576 = vrot.lane.b32.xlu0 %v218, 72
    %v577 = vpop.permute.xlu0 %576
    %578 = vrot.lane.b32.xlu0 %v219, 72
    %v579 = vpop.permute.xlu0 %578
    %580 = vrot.lane.b32.xlu0 %v220, 72
    %v581 = vpop.permute.xlu0 %580
    %582 = vrot.lane.b32.xlu0 %v221, 72
    %v583 = vpop.permute.xlu0 %582
    %584 = vrot.lane.b32.xlu0 %v222, 72
    %v585 = vpop.permute.xlu0 %584
    %586 = vrot.lane.b32.xlu0 %v223, 72
    %v587 = vpop.permute.xlu0 %586
    %vm640 = vcmask 293888
    %v641 = vsel %vm640, %v68, %v277
    %v642 = vsel %vm640, %v69, %v279
    %v643 = vsel %vm640, %v70, %v281
    %v644 = vsel %vm640, %v71, %v283
    %v645 = vsel %vm640, %v72, %v285
    %v646 = vsel %vm640, %v73, %v287
    %v647 = vsel %vm640, %v74, %v289
    %v648 = vsel %vm640, %v75, %v291
    %v649 = vsel %vm640, %v76, %v293
    %v650 = vsel %vm640, %v77, %v295
    %v651 = vsel %vm640, %v78, %v297
    %v652 = vsel %vm640, %v79, %v299
    %v653 = vsel %vm640, %v80, %v301
    %v654 = vsel %vm640, %v81, %v303
    %v655 = vsel %vm640, %v82, %v305
    %v656 = vsel %vm640, %v83, %v307
    %v657 = vsel %vm640, %v84, %v309
    %v658 = vsel %vm640, %v85, %v311
    %v659 = vsel %vm640, %v86, %v313
    %v660 = vsel %vm640, %v87, %v315
    %v661 = vsel %vm640, %v88, %v317
    %v662 = vsel %vm640, %v89, %v319
    %v663 = vsel %vm640, %v90, %v321
    %v664 = vsel %vm640, %v91, %v323
    %v665 = vsel %vm640, %v92, %v325
    %v666 = vsel %vm640, %v93, %v327
    %v667 = vsel %vm640, %v94, %v329
    %v668 = vsel %vm640, %v95, %v331
    %v669 = vsel %vm640, %v96, %v333
    %v670 = vsel %vm640, %v97, %v335
    %v671 = vsel %vm640, %v98, %v337
    %v672 = vsel %vm640, %v99, %v339
    %v673 = vsel %vm640, %v100, %v341
    %v674 = vsel %vm640, %v101, %v343
    %v675 = vsel %vm640, %v102, %v345
    %v676 = vsel %vm640, %v103, %v347
    %v677 = vsel %vm640, %v104, %v349
    %v678 = vsel %vm640, %v105, %v351
    %v679 = vsel %vm640, %v106, %v353
    %v680 = vsel %vm640, %v107, %v355
    %v681 = vsel %vm640, %v108, %v357
    %v682 = vsel %vm640, %v109, %v359
    %v683 = vsel %vm640, %v110, %v361
    %v684 = vsel %vm640, %v111, %v363
    %v685 = vsel %vm640, %v112, %v365
    %v686 = vsel %vm640, %v113, %v367
    %v687 = vsel %vm640, %v114, %v369
    %v688 = vsel %vm640, %v115, %v371
    %v689 = vsel %vm640, %v116, %v373
    %v690 = vsel %vm640, %v117, %v375
    %v691 = vsel %vm640, %v118, %v377
    %v692 = vsel %vm640, %v119, %v379
    %vm693 = vcmask 588800
    %v694 = vsel %vm693, %v641, %v485
    %v695 = vsel %vm693, %v642, %v487
    %v696 = vsel %vm693, %v643, %v489
    %v697 = vsel %vm693, %v644, %v491
    %v698 = vsel %vm693, %v645, %v493
    %v699 = vsel %vm693, %v646, %v495
    %v700 = vsel %vm693, %v647, %v497
    %v701 = vsel %vm693, %v648, %v499
    %v702 = vsel %vm693, %v649, %v501
    %v703 = vsel %vm693, %v650, %v503
    %v704 = vsel %vm693, %v651, %v505
    %v705 = vsel %vm693, %v652, %v507
    %v706 = vsel %vm693, %v653, %v509
    %v707 = vsel %vm693, %v654, %v511
    %v708 = vsel %vm693, %v655, %v513
    %v709 = vsel %vm693, %v656, %v515
    %v710 = vsel %vm693, %v657, %v517
    %v711 = vsel %vm693, %v658, %v519
    %v712 = vsel %vm693, %v659, %v521
    %v713 = vsel %vm693, %v660, %v523
    %v714 = vsel %vm693, %v661, %v525
    %v715 = vsel %vm693, %v662, %v527
    %v716 = vsel %vm693, %v663, %v529
    %v717 = vsel %vm693, %v664, %v531
    %v718 = vsel %vm693, %v665, %v533
    %v719 = vsel %vm693, %v666, %v535
    %v720 = vsel %vm693, %v667, %v537
    %v721 = vsel %vm693, %v668, %v539
    %v722 = vsel %vm693, %v669, %v541
    %v723 = vsel %vm693, %v670, %v543
    %v724 = vsel %vm693, %v671, %v545
    %v725 = vsel %vm693, %v672, %v547
    %v726 = vsel %vm693, %v673, %v549
    %v727 = vsel %vm693, %v674, %v551
    %v728 = vsel %vm693, %v675, %v553
    %v729 = vsel %vm693, %v676, %v555
    %v730 = vsel %vm693, %v677, %v557
    %v731 = vsel %vm693, %v678, %v559
    %v732 = vsel %vm693, %v679, %v561
    %v733 = vsel %vm693, %v680, %v563
    %v734 = vsel %vm693, %v681, %v565
    %v735 = vsel %vm693, %v682, %v567
    %v736 = vsel %vm693, %v683, %v569
    %v737 = vsel %vm693, %v684, %v571
    %v738 = vsel %vm693, %v685, %v573
    %v739 = vsel %vm693, %v686, %v575
    %v740 = vsel %vm693, %v687, %v577
    %v741 = vsel %vm693, %v688, %v579
    %v742 = vsel %vm693, %v689, %v581
    %v743 = vsel %vm693, %v690, %v583
    %v744 = vsel %vm693, %v691, %v585
    %v745 = vsel %vm693, %v692, %v587
    %v746 = vpack.c.bf16 %v695, %v694
    %v747 = vpack.c.bf16 %v697, %v696
    %v748 = vpack.c.bf16 %v699, %v698
    %v749 = vpack.c.bf16 %v701, %v700
    %v750 = vpack.c.bf16 %v703, %v702
    %v751 = vpack.c.bf16 %v705, %v704
    %v752 = vpack.c.bf16 %v707, %v706
    %v753 = vpack.c.bf16 %v709, %v708
    %v754 = vpack.c.bf16 %v711, %v710
    %v755 = vpack.c.bf16 %v713, %v712
    %v756 = vpack.c.bf16 %v715, %v714
    %v757 = vpack.c.bf16 %v717, %v716
    %v758 = vpack.c.bf16 %v719, %v718
    %v759 = vpack.c.bf16 %v721, %v720
    %v760 = vpack.c.bf16 %v723, %v722
    %v761 = vpack.c.bf16 %v725, %v724
    %v762 = vpack.c.bf16 %v727, %v726
    %v763 = vpack.c.bf16 %v729, %v728
    %v764 = vpack.c.bf16 %v731, %v730
    %v765 = vpack.c.bf16 %v733, %v732
    %v766 = vpack.c.bf16 %v735, %v734
    %v767 = vpack.c.bf16 %v737, %v736
    %v768 = vpack.c.bf16 %v739, %v738
    %v769 = vpack.c.bf16 %v741, %v740
    %v770 = vpack.c.bf16 %v743, %v742
    %v771 = vpack.c.bf16 %v745, %v744
    %v772 = vld [vmem:[%s1] sm:$0xf]
    %v773 = vld [vmem:[%s1 + $0x4] sm:$0xf]
    %v774 = vld [vmem:[%s1 + $0x8] sm:$0xf]
    %v775 = vld [vmem:[%s1 + $0xc] sm:$0xf]
    %v776 = vld [vmem:[%s1 + $0x10] sm:$0xf]
    %v777 = vld [vmem:[%s1 + $0x14] sm:$0xf]
    %v778 = vld [vmem:[%s1 + $0x18] sm:$0xf]
    %v779 = vld [vmem:[%s1 + $0x1c] sm:$0xf]
    %v780 = vld [vmem:[%s1 + $0x20] sm:$0xf]
    %v781 = vld [vmem:[%s1 + $0x24] sm:$0xf]
    %v782 = vld [vmem:[%s1 + $0x28] sm:$0xf]
    %v783 = vld [vmem:[%s1 + $0x2c] sm:$0xf]
    %v784 = vld [vmem:[%s1 + $0x30] sm:$0xf]
    %v785 = vld [vmem:[%s1 + $0x34] sm:$0x3]
    %v786 = vld [vmem:[%s2] sm:$0x1]
    %v788 = vlaneseq
    %v789 = vshrl.u32 %v788, 7
    %v790 = vsub.s32 0, %v789
    %v791 = vrot.slane %v786, %v790
    %v807 = vunpack.c.l.b16 %v772
    %v808 = vunpack.c.l.b16 %v773
    %v809 = vunpack.c.l.b16 %v774
    %v810 = vunpack.c.l.b16 %v775
    %v811 = vunpack.c.l.b16 %v776
    %v812 = vunpack.c.l.b16 %v777
    %v813 = vunpack.c.l.b16 %v778
    %v814 = vunpack.c.l.b16 %v779
    %v815 = vunpack.c.l.b16 %v780
    %v816 = vunpack.c.l.b16 %v781
    %v817 = vunpack.c.l.b16 %v782
    %v818 = vunpack.c.l.b16 %v783
    %v819 = vunpack.c.l.b16 %v784
    %v820 = vunpack.c.l.b16 %v785
    %v821 = vpack.c.b16 %v808, %v807
    %v822 = vpack.c.b16 %v810, %v809
    %v823 = vpack.c.b16 %v812, %v811
    %v824 = vpack.c.b16 %v814, %v813
    %v825 = vpack.c.b16 %v816, %v815
    %v826 = vpack.c.b16 %v818, %v817
    %v827 = vpack.c.b16 %v820, %v819
    %vm834 = vcmask 883712
    %v836 = vsel %vm834, %v746, 0
    %v839 = vsel %vm834, %v747, 0
    %v842 = vsel %vm834, %v748, 0
    %v845 = vsel %vm834, %v749, 0
    %v848 = vsel %vm834, %v750, 0
    %v851 = vsel %vm834, %v751, 0
    %v854 = vsel %vm834, %v752, 0
    %v857 = vsel %vm834, %v753, 0
    %v860 = vsel %vm834, %v754, 0
    %v863 = vsel %vm834, %v755, 0
    %v866 = vsel %vm834, %v756, 0
    %v869 = vsel %vm834, %v757, 0
    %v872 = vsel %vm834, %v758, 0
    %v875 = vsel %vm834, %v759, 0
    %v878 = vsel %vm834, %v760, 0
    %v881 = vsel %vm834, %v761, 0
    %v884 = vsel %vm834, %v762, 0
    %v887 = vsel %vm834, %v763, 0
    %v890 = vsel %vm834, %v764, 0
    %v893 = vsel %vm834, %v765, 0
    %v896 = vsel %vm834, %v766, 0
    %v899 = vsel %vm834, %v767, 0
    %v902 = vsel %vm834, %v768, 0
    %v905 = vsel %vm834, %v769, 0
    %v908 = vsel %vm834, %v770, 0
    %v911 = vsel %vm834, %v771, 0
    %vm913 = vcmask 1045504
    %v915 = vsel %vm913, %v827, 0
    %917 = vmatprep.subr.bf16.mxu0 0
    %918 = vmatpush1.bf16.msra.mxu0 %v821
    %919 = vmatprep.subr.bf16.mxu0 0
    %920 = vmatpush1.bf16.msra.mxu0 %v822
    %921 = vmatprep.subr.bf16.mxu0 0
    %922 = vmatpush1.bf16.msra.mxu0 %v823
    %923 = vmatprep.subr.bf16.mxu0 0
    %924 = vmatpush1.bf16.msra.mxu0 %v824
    %925 = vmatprep.subr.bf16.mxu0 0
    %926 = vmatpush1.bf16.msra.mxu0 %v825
    %927 = vmatprep.subr.bf16.mxu0 0
    %928 = vmatpush1.bf16.msra.mxu0 %v826
    %929 = vmatprep.subr.bf16.mxu0 0
    %930 = vmatpush1.bf16.msra.mxu0 %v915
    %931 = vmatprep.subr.bf16.mxu0 0
    %932 = vmatpush1.bf16.msra.mxu0 0
    %933 = vmatprep.subr.bf16.mxu0 0
    %934 = vmatpush1.bf16.msra.mxu0 0
    %935 = vmatprep.subr.bf16.mxu0 0
    %936 = vmatpush1.bf16.msra.mxu0 0
    %937 = vmatprep.subr.bf16.mxu0 0
    %938 = vmatpush1.bf16.msra.mxu0 0
    %939 = vmatprep.subr.bf16.mxu0 0
    %940 = vmatpush1.bf16.msra.mxu0 0
    %941 = vmatprep.subr.bf16.mxu0 0
    %942 = vmatpush1.bf16.msra.mxu0 0
    %943 = vmatprep.subr.bf16.mxu0 0
    %944 = vmatpush1.bf16.msra.mxu0 0
    %945 = vmatprep.subr.bf16.mxu0 0
    %946 = vmatpush1.bf16.msra.mxu0 0
    %947 = vmatprep.subr.bf16.mxu0 0
    %948 = vmatpush1.bf16.msra.mxu0 0
    %949 = vmatprep.mubr.bf16.mxu0 0
    %950 = vmatmul.mubr.bf16.gmra.mrb[0].mxu0 %v836
    %v951 = vpop.f32.mrb[0].mxu0
    %v952 = vadd.f32 %v791, %v951
    %v953 = vpop.f32.mrb[0].mxu0
    %v954 = vpop.f32.mrb[0].mxu0
    %v955 = vadd.f32 %v791, %v954
    %v956 = vpop.f32.mrb[0].mxu0
    %957 = vmatprep.mubr.bf16.mxu0 0
    %958 = vmatmul.mubr.bf16.gmra.mrb[0].mxu0 %v839
    %v959 = vpop.f32.mrb[0].mxu0
    %v960 = vadd.f32 %v791, %v959
    %v961 = vpop.f32.mrb[0].mxu0
    %v962 = vpop.f32.mrb[0].mxu0
    %v963 = vadd.f32 %v791, %v962
    %v964 = vpop.f32.mrb[0].mxu0
    %965 = vmatprep.mubr.bf16.mxu0 0
    %966 = vmatmul.mubr.bf16.gmra.mrb[0].mxu0 %v842
    %v967 = vpop.f32.mrb[0].mxu0
    %v968 = vadd.f32 %v791, %v967
    %v969 = vpop.f32.mrb[0].mxu0
    %v970 = vpop.f32.mrb[0].mxu0
    %v971 = vadd.f32 %v791, %v970
    %v972 = vpop.f32.mrb[0].mxu0
    %973 = vmatprep.mubr.bf16.mxu0 0
    %974 = vmatmul.mubr.bf16.gmra.mrb[0].mxu0 %v845
    %v975 = vpop.f32.mrb[0].mxu0
    %v976 = vadd.f32 %v791, %v975
    %v977 = vpop.f32.mrb[0].mxu0
    %v978 = vpop.f32.mrb[0].mxu0
    %v979 = vadd.f32 %v791, %v978
    %v980 = vpop.f32.mrb[0].mxu0
    %981 = vmatprep.mubr.bf16.mxu0 0
    %982 = vmatmul.mubr.bf16.gmra.mrb[0].mxu0 %v848
    %v983 = vpop.f32.mrb[0].mxu0
    %v984 = vadd.f32 %v791, %v983
    %v985 = vpop.f32.mrb[0].mxu0
    %v986 = vpop.f32.mrb[0].mxu0
    %v987 = vadd.f32 %v791, %v986
    %v988 = vpop.f32.mrb[0].mxu0
    %989 = vmatprep.mubr.bf16.mxu0 0
    %990 = vmatmul.mubr.bf16.gmra.mrb[0].mxu0 %v851
    %v991 = vpop.f32.mrb[0].mxu0
    %v992 = vadd.f32 %v791, %v991
    %v993 = vpop.f32.mrb[0].mxu0
    %v994 = vpop.f32.mrb[0].mxu0
    %v995 = vadd.f32 %v791, %v994
    %v996 = vpop.f32.mrb[0].mxu0
    %997 = vmatprep.mubr.bf16.mxu0 0
    %998 = vmatmul.mubr.bf16.gmra.mrb[0].mxu0 %v854
    %v999 = vpop.f32.mrb[0].mxu0
    %v1000 = vadd.f32 %v791, %v999
    %v1001 = vpop.f32.mrb[0].mxu0
    %v1002 = vpop.f32.mrb[0].mxu0
    %v1003 = vadd.f32 %v791, %v1002
    %v1004 = vpop.f32.mrb[0].mxu0
    %1005 = vmatprep.mubr.bf16.mxu0 0
    %1006 = vmatmul.mubr.bf16.gmra.mrb[0].mxu0 %v857
    %v1007 = vpop.f32.mrb[0].mxu0
    %v1008 = vadd.f32 %v791, %v1007
    %v1009 = vpop.f32.mrb[0].mxu0
    %v1010 = vpop.f32.mrb[0].mxu0
    %v1011 = vadd.f32 %v791, %v1010
    %v1012 = vpop.f32.mrb[0].mxu0
    %1013 = vmatprep.mubr.bf16.mxu0 0
    %1014 = vmatmul.mubr.bf16.gmra.mrb[0].mxu0 %v860
    %v1015 = vpop.f32.mrb[0].mxu0
    %v1016 = vadd.f32 %v791, %v1015
    %v1017 = vpop.f32.mrb[0].mxu0
    %v1018 = vpop.f32.mrb[0].mxu0
    %v1019 = vadd.f32 %v791, %v1018
    %v1020 = vpop.f32.mrb[0].mxu0
    %1021 = vmatprep.mubr.bf16.mxu0 0
    %1022 = vmatmul.mubr.bf16.gmra.mrb[0].mxu0 %v863
    %v1023 = vpop.f32.mrb[0].mxu0
    %v1024 = vadd.f32 %v791, %v1023
    %v1025 = vpop.f32.mrb[0].mxu0
    %v1026 = vpop.f32.mrb[0].mxu0
    %v1027 = vadd.f32 %v791, %v1026
    %v1028 = vpop.f32.mrb[0].mxu0
    %1029 = vmatprep.mubr.bf16.mxu0 0
    %1030 = vmatmul.mubr.bf16.gmra.mrb[0].mxu0 %v866
    %v1031 = vpop.f32.mrb[0].mxu0
    %v1032 = vadd.f32 %v791, %v1031
    %v1033 = vpop.f32.mrb[0].mxu0
    %v1034 = vpop.f32.mrb[0].mxu0
    %v1035 = vadd.f32 %v791, %v1034
    %v1036 = vpop.f32.mrb[0].mxu0
    %1037 = vmatprep.mubr.bf16.mxu0 0
    %1038 = vmatmul.mubr.bf16.gmra.mrb[0].mxu0 %v869
    %v1039 = vpop.f32.mrb[0].mxu0
    %v1040 = vadd.f32 %v791, %v1039
    %v1041 = vpop.f32.mrb[0].mxu0
    %v1042 = vpop.f32.mrb[0].mxu0
    %v1043 = vadd.f32 %v791, %v1042
    %v1044 = vpop.f32.mrb[0].mxu0
    %1045 = vmatprep.mubr.bf16.mxu0 0
    %1046 = vmatmul.mubr.bf16.gmra.mrb[0].mxu0 %v872
    %v1047 = vpop.f32.mrb[0].mxu0
    %v1048 = vadd.f32 %v791, %v1047
    %v1049 = vpop.f32.mrb[0].mxu0
    %v1050 = vpop.f32.mrb[0].mxu0
    %v1051 = vadd.f32 %v791, %v1050
    %v1052 = vpop.f32.mrb[0].mxu0
    %1053 = vmatprep.mubr.bf16.mxu0 0
    %1054 = vmatmul.mubr.bf16.gmra.mrb[0].mxu0 %v875
    %v1055 = vpop.f32.mrb[0].mxu0
    %v1056 = vadd.f32 %v791, %v1055
    %v1057 = vpop.f32.mrb[0].mxu0
    %v1058 = vpop.f32.mrb[0].mxu0
    %v1059 = vadd.f32 %v791, %v1058
    %v1060 = vpop.f32.mrb[0].mxu0
    %1061 = vmatprep.mubr.bf16.mxu0 0
    %1062 = vmatmul.mubr.bf16.gmra.mrb[0].mxu0 %v878
    %v1063 = vpop.f32.mrb[0].mxu0
    %v1064 = vadd.f32 %v791, %v1063
    %v1065 = vpop.f32.mrb[0].mxu0
    %v1066 = vpop.f32.mrb[0].mxu0
    %v1067 = vadd.f32 %v791, %v1066
    %v1068 = vpop.f32.mrb[0].mxu0
    %1069 = vmatprep.mubr.bf16.mxu0 0
    %1070 = vmatmul.mubr.bf16.gmra.mrb[0].mxu0 %v881
    %v1071 = vpop.f32.mrb[0].mxu0
    %v1072 = vadd.f32 %v791, %v1071
    %v1073 = vpop.f32.mrb[0].mxu0
    %v1074 = vpop.f32.mrb[0].mxu0
    %v1075 = vadd.f32 %v791, %v1074
    %v1076 = vpop.f32.mrb[0].mxu0
    %1077 = vmatprep.mubr.bf16.mxu0 0
    %1078 = vmatmul.mubr.bf16.gmra.mrb[0].mxu0 %v884
    %v1079 = vpop.f32.mrb[0].mxu0
    %v1080 = vadd.f32 %v791, %v1079
    %v1081 = vpop.f32.mrb[0].mxu0
    %v1082 = vpop.f32.mrb[0].mxu0
    %v1083 = vadd.f32 %v791, %v1082
    %v1084 = vpop.f32.mrb[0].mxu0
    %1085 = vmatprep.mubr.bf16.mxu0 0
    %1086 = vmatmul.mubr.bf16.gmra.mrb[0].mxu0 %v887
    %v1087 = vpop.f32.mrb[0].mxu0
    %v1088 = vadd.f32 %v791, %v1087
    %v1089 = vpop.f32.mrb[0].mxu0
    %v1090 = vpop.f32.mrb[0].mxu0
    %v1091 = vadd.f32 %v791, %v1090
    %v1092 = vpop.f32.mrb[0].mxu0
    %1093 = vmatprep.mubr.bf16.mxu0 0
    %1094 = vmatmul.mubr.bf16.gmra.mrb[0].mxu0 %v890
    %v1095 = vpop.f32.mrb[0].mxu0
    %v1096 = vadd.f32 %v791, %v1095
    %v1097 = vpop.f32.mrb[0].mxu0
    %v1098 = vpop.f32.mrb[0].mxu0
    %v1099 = vadd.f32 %v791, %v1098
    %v1100 = vpop.f32.mrb[0].mxu0
    %1101 = vmatprep.mubr.bf16.mxu0 0
    %1102 = vmatmul.mubr.bf16.gmra.mrb[0].mxu0 %v893
    %v1103 = vpop.f32.mrb[0].mxu0
    %v1104 = vadd.f32 %v791, %v1103
    %v1105 = vpop.f32.mrb[0].mxu0
    %v1106 = vpop.f32.mrb[0].mxu0
    %v1107 = vadd.f32 %v791, %v1106
    %v1108 = vpop.f32.mrb[0].mxu0
    %1109 = vmatprep.mubr.bf16.mxu0 0
    %1110 = vmatmul.mubr.bf16.gmra.mrb[0].mxu0 %v896
    %v1111 = vpop.f32.mrb[0].mxu0
    %v1112 = vadd.f32 %v791, %v1111
    %v1113 = vpop.f32.mrb[0].mxu0
    %v1114 = vpop.f32.mrb[0].mxu0
    %v1115 = vadd.f32 %v791, %v1114
    %v1116 = vpop.f32.mrb[0].mxu0
    %1117 = vmatprep.mubr.bf16.mxu0 0
    %1118 = vmatmul.mubr.bf16.gmra.mrb[0].mxu0 %v899
    %v1119 = vpop.f32.mrb[0].mxu0
    %v1120 = vadd.f32 %v791, %v1119
    %v1121 = vpop.f32.mrb[0].mxu0
    %v1122 = vpop.f32.mrb[0].mxu0
    %v1123 = vadd.f32 %v791, %v1122
    %v1124 = vpop.f32.mrb[0].mxu0
    %1125 = vmatprep.mubr.bf16.mxu0 0
    %1126 = vmatmul.mubr.bf16.gmra.mrb[0].mxu0 %v902
    %v1127 = vpop.f32.mrb[0].mxu0
    %v1128 = vadd.f32 %v791, %v1127
    %v1129 = vpop.f32.mrb[0].mxu0
    %v1130 = vpop.f32.mrb[0].mxu0
    %v1131 = vadd.f32 %v791, %v1130
    %v1132 = vpop.f32.mrb[0].mxu0
    %1133 = vmatprep.mubr.bf16.mxu0 0
    %1134 = vmatmul.mubr.bf16.gmra.mrb[0].mxu0 %v905
    %v1135 = vpop.f32.mrb[0].mxu0
    %v1136 = vadd.f32 %v791, %v1135
    %v1137 = vpop.f32.mrb[0].mxu0
    %v1138 = vpop.f32.mrb[0].mxu0
    %v1139 = vadd.f32 %v791, %v1138
    %v1140 = vpop.f32.mrb[0].mxu0
    %1141 = vmatprep.mubr.bf16.mxu0 0
    %1142 = vmatmul.mubr.bf16.gmra.mrb[0].mxu0 %v908
    %v1143 = vpop.f32.mrb[0].mxu0
    %v1144 = vadd.f32 %v791, %v1143
    %v1145 = vpop.f32.mrb[0].mxu0
    %v1146 = vpop.f32.mrb[0].mxu0
    %v1147 = vadd.f32 %v791, %v1146
    %v1148 = vpop.f32.mrb[0].mxu0
    %1149 = vmatprep.mubr.bf16.mxu0 0
    %1150 = vmatmul.mubr.bf16.gmra.mrb[0].mxu0 %v911
    %v1151 = vpop.f32.mrb[0].mxu0
    %v1152 = vadd.f32 %v791, %v1151
    %v1153 = vpop.f32.mrb[0].mxu0
    %v1154 = vpop.f32.mrb[0].mxu0
    %v1155 = vadd.f32 %v791, %v1154
    %v1156 = vpop.f32.mrb[0].mxu0
    %1157 = vdwg.mxu0
    %v1158 = vtanh.pop %v952
    %v1159 = vtanh.pop %v955
    %v1160 = vtanh.pop %v960
    %v1161 = vtanh.pop %v963
    %v1162 = vtanh.pop %v968
    %v1163 = vtanh.pop %v971
    %v1164 = vtanh.pop %v976
    %v1165 = vtanh.pop %v979
    %v1166 = vtanh.pop %v984
    %v1167 = vtanh.pop %v987
    %v1168 = vtanh.pop %v992
    %v1169 = vtanh.pop %v995
    %v1170 = vtanh.pop %v1000
    %v1171 = vtanh.pop %v1003
    %v1172 = vtanh.pop %v1008
    %v1173 = vtanh.pop %v1011
    %v1174 = vtanh.pop %v1016
    %v1175 = vtanh.pop %v1019
    %v1176 = vtanh.pop %v1024
    %v1177 = vtanh.pop %v1027
    %v1178 = vtanh.pop %v1032
    %v1179 = vtanh.pop %v1035
    %v1180 = vtanh.pop %v1040
    %v1181 = vtanh.pop %v1043
    %v1182 = vtanh.pop %v1048
    %v1183 = vtanh.pop %v1051
    %v1184 = vtanh.pop %v1056
    %v1185 = vtanh.pop %v1059
    %v1186 = vtanh.pop %v1064
    %v1187 = vtanh.pop %v1067
    %v1188 = vtanh.pop %v1072
    %v1189 = vtanh.pop %v1075
    %v1190 = vtanh.pop %v1080
    %v1191 = vtanh.pop %v1083
    %v1192 = vtanh.pop %v1088
    %v1193 = vtanh.pop %v1091
    %v1194 = vtanh.pop %v1096
    %v1195 = vtanh.pop %v1099
    %v1196 = vtanh.pop %v1104
    %v1197 = vtanh.pop %v1107
    %v1198 = vtanh.pop %v1112
    %v1199 = vtanh.pop %v1115
    %v1200 = vtanh.pop %v1120
    %v1201 = vtanh.pop %v1123
    %v1202 = vtanh.pop %v1128
    %v1203 = vtanh.pop %v1131
    %v1204 = vtanh.pop %v1136
    %v1205 = vtanh.pop %v1139
    %v1206 = vtanh.pop %v1144
    %v1207 = vtanh.pop %v1147
    %v1208 = vtanh.pop %v1152
    %v1209 = vtanh.pop %v1155
    %v1210 = vmax.f32 %v1158, %v1171
    %v1211 = vmax.f32 %v1210, %v1184
    %v1212 = vmax.f32 %v1211, %v1197
    %v1213 = vmax.f32 %v1159, %v1172
    %v1214 = vmax.f32 %v1213, %v1185
    %v1215 = vmax.f32 %v1214, %v1198
    %v1216 = vmax.f32 %v1160, %v1173
    %v1217 = vmax.f32 %v1216, %v1186
    %v1218 = vmax.f32 %v1217, %v1199
    %v1219 = vmax.f32 %v1161, %v1174
    %v1220 = vmax.f32 %v1219, %v1187
    %v1221 = vmax.f32 %v1220, %v1200
    %v1222 = vmax.f32 %v1162, %v1175
    %v1223 = vmax.f32 %v1222, %v1188
    %v1224 = vmax.f32 %v1223, %v1201
    %v1225 = vmax.f32 %v1163, %v1176
    %v1226 = vmax.f32 %v1225, %v1189
    %v1227 = vmax.f32 %v1226, %v1202
    %v1228 = vmax.f32 %v1164, %v1177
    %v1229 = vmax.f32 %v1228, %v1190
    %v1230 = vmax.f32 %v1229, %v1203
    %v1231 = vmax.f32 %v1165, %v1178
    %v1232 = vmax.f32 %v1231, %v1191
    %v1233 = vmax.f32 %v1232, %v1204
    %v1234 = vmax.f32 %v1166, %v1179
    %v1235 = vmax.f32 %v1234, %v1192
    %v1236 = vmax.f32 %v1235, %v1205
    %v1237 = vmax.f32 %v1167, %v1180
    %v1238 = vmax.f32 %v1237, %v1193
    %v1239 = vmax.f32 %v1238, %v1206
    %v1240 = vmax.f32 %v1168, %v1181
    %v1241 = vmax.f32 %v1240, %v1194
    %v1242 = vmax.f32 %v1241, %v1207
    %v1243 = vmax.f32 %v1169, %v1182
    %v1244 = vmax.f32 %v1243, %v1195
    %v1245 = vmax.f32 %v1244, %v1208
    %v1246 = vmax.f32 %v1170, %v1183
    %v1247 = vmax.f32 %v1246, %v1196
    %v1248 = vmax.f32 %v1247, %v1209
    %1249 = vst [vmem:[#allocation2] sm:$0xff] %v1212
    %1250 = vst [vmem:[#allocation2 + $0x8] sm:$0xff] %v1215
    %1251 = vst [vmem:[#allocation2 + $0x10] sm:$0xff] %v1218
    %1252 = vst [vmem:[#allocation2 + $0x18] sm:$0xff] %v1221
    %1253 = vst [vmem:[#allocation2 + $0x20] sm:$0xff] %v1224
    %1254 = vst [vmem:[#allocation2 + $0x28] sm:$0xff] %v1227
    %1255 = vst [vmem:[#allocation2 + $0x30] sm:$0xff] %v1230
    %1256 = vst [vmem:[#allocation2 + $0x38] sm:$0xff] %v1233
    %1257 = vst [vmem:[#allocation2 + $0x40] sm:$0xff] %v1236
    %1258 = vst [vmem:[#allocation2 + $0x48] sm:$0xff] %v1239
    %1259 = vst [vmem:[#allocation2 + $0x50] sm:$0xff] %v1242
    %1260 = vst [vmem:[#allocation2 + $0x58] sm:$0xff] %v1245
    %1261 = vst [vmem:[#allocation2 + $0x60] sm:$0xff] %v1248
    // Predicated region
    $region14: #{tpu_custom_call.1} parent=1 // pred_check
      _
    $region15: #{tpu_custom_call.1} parent=1 // pred_check_branch
      %1263 = sbr.rel (0) target = $region17
    $region16: #{tpu_custom_call.1} parent=1 // pred_region
      %s1265 = ssub.s32 1664, 1664
      %1266 = vsyncadd [#allocation3], %s1265
      %s1267 = sshll.u32 [#allocation2], 4
      %s1268 = int_to_ptr.vmem [resolvable:$true] %s1267
      %1273 = dma.vmem_to_hbm [thread:$0]  %s1268, 1664, %s3, [#allocation3], 128, 128, 8
    $region17: #{tpu_custom_call.1} parent=1 // pred_fallthru
      _
    // Predicated region
    $region18: #{tpu_custom_call.1} parent=1 // pred_check
      _
    $region19: #{tpu_custom_call.1} parent=1 // pred_check_branch
      %1275 = sbr.rel (0) target = $region21
    $region20: #{tpu_custom_call.1} parent=1 // pred_region
      %1276 = dma.done [#allocation3], 1664
    $region21: #{tpu_custom_call.1} parent=1 // pred_fallthru
      _
    %1277 = vsyncpa [#allocation3], 1

</llo_original>
